<compile_context>
chip_gen: v6e
topology: v6e:2x2x1
jax: 0.10.0
libtpu: 0.0.40
codegen_flags: <defaults>
</compile_context>

<pallas_src>
import functools

import jax
import jax.numpy as jnp
from jax.experimental import pallas as pl
from jax.experimental.pallas import tpu as pltpu


def _round_up(a, b):
    return (a + b - 1) // b * b


def _chip_default_tn():
    # 256 matches the 256-wide MXU on v6e/v7x; older generations keep 128.
    try:
        kind = jax.devices()[0].device_kind.lower()
    except Exception:
        return 128
    if any(v in kind for v in ("v2", "v3", "v4", "v5")):
        return 128
    return 256


_DEFAULT_TN = _chip_default_tn()


# ---------- Pass 1: tiled conv-GEMM + per-(M tile) channel sum / sum-of-squares ----------
def conv_stats_kernel(p_ref, w_ref, y_ref, psum_ref, psumsq_ref, acc_ref, *,
                      tk, w_resident):
    k = pl.program_id(2)

    @pl.when(k == 0)
    def _():
        acc_ref[...] = jnp.zeros_like(acc_ref)

    if w_resident:
        # Whole (Kp, tn) weight strip is VMEM-resident; slice the current K chunk.
        w_blk = w_ref[pl.ds(pl.multiple_of(k * tk, tk), tk), :]
    else:
        w_blk = w_ref[...]

    acc_ref[...] += jnp.dot(p_ref[...], w_blk,
                            preferred_element_type=jnp.float32)

    @pl.when(k == pl.num_programs(2) - 1)
    def _():
        y = acc_ref[...]                                   # f32 accumulator
        y_ref[...] = y.astype(y_ref.dtype)                 # bf16 writeback
        # Per-M-tile partial stats (f32, from the f32 accumulator). One-pass
        # E[y^2]-E[y]^2 variance; clamped >=0 downstream.
        psum_ref[...] = jnp.sum(y, axis=0, keepdims=True)[None]
        psumsq_ref[...] = jnp.sum(y * y, axis=0, keepdims=True)[None]


# ---------- Pass 2: folded BN scale/shift + LeakyReLU (pure streaming) ----------
def bn_lrelu_kernel(scale_ref, shift_ref, y_ref, o_ref, *, neg_slope):
    z = y_ref[...].astype(jnp.float32) * scale_ref[...] + shift_ref[...]
    o_ref[...] = jnp.where(z >= 0, z, neg_slope * z)


@functools.partial(jax.jit, static_argnames=(
    "stride", "padding", "eps", "neg_slope", "tm", "tk", "tn", "nchw_output"))
def cbl_forward(x, weight, bias, gamma, beta, *, stride=2, padding=1,
                eps=1e-5, neg_slope=0.2, tm=1024, tk=2048, tn=None,
                nchw_output=True):
    """x: (N, Cin, H, W) NCHW f32.  weight: (Cout, Cin, KH, KW)."""
    del bias  # exact: training-mode BN subtracts the per-channel mean -> conv bias cancels

    N, Cin, H, W = x.shape
    Cout, _, KH, KW = weight.shape
    Ho = (H + 2 * padding - KH) // stride + 1
    Wo = (W + 2 * padding - KW) // stride + 1
    M = N * Ho * Wo
    K = Cin * KH * KW

    # ---- tile selection -------------------------------------------------------
    if tn is None:
        tn = _DEFAULT_TN
    tn = min(tn, _round_up(Cout, 128))          # lane-dense, multiple of 128
    tm = min(tm, _round_up(M, 8))               # multiple of 8
    tk = min(tk, _round_up(K, 128))             # multiple of 128

    # VMEM budget (v7x has only 64 MiB per TensorCore): keep double-buffered blocks
    # + scratch under ~36 MiB, shrinking weight residency / tk / tm if needed.
    budget = 36 * 1024 * 1024

    def _est(tm_, tk_, w_res):
        kp_ = _round_up(K, tk_)
        b = tm_ * tk_ * 2 * 2                        # patches blocks (bf16, 2 buffers)
        b += (kp_ if w_res else tk_) * tn * 2 * 2    # weight blocks (bf16, 2 buffers)
        b += tm_ * tn * 2 * 2                        # y blocks (bf16, 2 buffers)
        b += tm_ * tn * 4                            # f32 accumulator scratch
        b += 4 * tn * 4 * 2                          # partial-stat blocks
        return b

    w_resident = _round_up(K, tk) * tn * 2 * 2 <= 16 * 1024 * 1024
    while _est(tm, tk, w_resident) > budget:
        if w_resident:
            w_resident = False
        elif tk >= 512 and tk % 256 == 0:
            tk //= 2
        elif tm >= 256 and tm % 16 == 0:
            tm //= 2
        else:
            break

    Mp = _round_up(M, tm)
    Kp = _round_up(K, tk)
    Cp = _round_up(Cout, tn)
    n_c, n_m, n_k = Cp // tn, Mp // tm, Kp // tk

    # ---- im2col in NHWC/bf16 (channels on the lane axis) ----------------------
    # TODO(synk): fuse im2col into the kernel (per-tap strided DMA) to drop this HBM tensor.
    x_nhwc = jnp.transpose(x, (0, 2, 3, 1)).astype(jnp.bfloat16)   # cast BEFORE im2col
    xp = jnp.pad(x_nhwc, ((0, 0), (padding, padding), (padding, padding), (0, 0)))
    taps = []
    for kh in range(KH):
        for kw in range(KW):
            taps.append(xp[:, kh:kh + stride * Ho:stride,
                           kw:kw + stride * Wo:stride, :])
    patches = jnp.concatenate(taps, axis=-1).reshape(M, K)          # K order: (kh, kw, cin)
    patches = jnp.pad(patches, ((0, Mp - M), (0, Kp - K)))

    wmat = jnp.transpose(weight, (2, 3, 1, 0)).reshape(K, Cout).astype(jnp.bfloat16)
    wmat = jnp.pad(wmat, ((0, Kp - K), (0, Cp - Cout)))

    # ---- Pass 1: GEMM + per-M-tile partial stats ------------------------------
    if w_resident:
        w_spec = pl.BlockSpec((Kp, tn), lambda j, i, k: (0, j))     # fetched once per j
    else:
        w_spec = pl.BlockSpec((tk, tn), lambda j, i, k: (k, j))

    y, psum, psumsq = pl.pallas_call(
        functools.partial(conv_stats_kernel, tk=tk, w_resident=w_resident),
        out_shape=(jax.ShapeDtypeStruct((Mp, Cp), jnp.bfloat16),
                   jax.ShapeDtypeStruct((n_m, 1, Cp), jnp.float32),
                   jax.ShapeDtypeStruct((n_m, 1, Cp), jnp.float32)),
        grid=(n_c, n_m, n_k),
        in_specs=[pl.BlockSpec((tm, tk), lambda j, i, k: (i, k)), w_spec],
        out_specs=(pl.BlockSpec((tm, tn), lambda j, i, k: (i, j)),
                   pl.BlockSpec((1, 1, tn), lambda j, i, k: (i, 0, j)),
                   pl.BlockSpec((1, 1, tn), lambda j, i, k: (i, 0, j))),
        scratch_shapes=[pltpu.VMEM((tm, tn), jnp.float32)],
        compiler_params=pltpu.CompilerParams(
            dimension_semantics=("parallel", "parallel", "arbitrary"),
            vmem_limit_bytes=48 * 1024 * 1024),
    )(patches, wmat)

    # ---- Finalize BN stats -> folded scale/shift (tiny XLA op) ----------------
    ch_sum = jnp.sum(psum, axis=(0, 1))                             # (Cp,)
    ch_sumsq = jnp.sum(psumsq, axis=(0, 1))
    mean = ch_sum / M
    var = jnp.maximum(ch_sumsq / M - mean * mean, 0.0)              # biased var (training BN)
    gamma_p = jnp.pad(gamma.astype(jnp.float32), (0, Cp - Cout), constant_values=1.0)
    beta_p = jnp.pad(beta.astype(jnp.float32), (0, Cp - Cout))
    scale = gamma_p * jax.lax.rsqrt(var + eps)
    shift = beta_p - mean * scale
    scale = scale.reshape(1, Cp)
    shift = shift.reshape(1, Cp)

    # ---- Pass 2: streaming scale*y + shift + LeakyReLU ------------------------
    tm2 = tm
    tn2 = tn
    while tn2 * 2 <= min(Cp, 512) and Cp % (tn2 * 2) == 0:
        tn2 *= 2
    n_c2, n_m2 = Cp // tn2, Mp // tm2

    out = pl.pallas_call(
        functools.partial(bn_lrelu_kernel, neg_slope=neg_slope),
        out_shape=jax.ShapeDtypeStruct((Mp, Cp), jnp.float32),
        grid=(n_c2, n_m2),
        in_specs=[pl.BlockSpec((1, tn2), lambda j, i: (0, j)),
                  pl.BlockSpec((1, tn2), lambda j, i: (0, j)),
                  pl.BlockSpec((tm2, tn2), lambda j, i: (i, j))],
        out_specs=pl.BlockSpec((tm2, tn2), lambda j, i: (i, j)),
        compiler_params=pltpu.CompilerParams(
            dimension_semantics=("parallel", "parallel"),
            vmem_limit_bytes=48 * 1024 * 1024),
    )(scale, shift, y)

    out = out[:M, :Cout].reshape(N, Ho, Wo, Cout)
    if nchw_output:
        # Matches PyTorch's NCHW output. Pass nchw_output=False to keep NHWC and
        # save an extra HBM round trip when the next layer accepts it.
        out = out.transpose(0, 3, 1, 2)
    return out


def cbl_reference(x, weight, bias, gamma, beta, *, eps=1e-5, neg_slope=0.2):
    """Pure-JAX f32 reference mirroring the PyTorch module (training-mode BN)."""
    y = jax.lax.conv_general_dilated(
        x, weight, window_strides=(2, 2), padding=[(1, 1), (1, 1)],
        dimension_numbers=("NCHW", "OIHW", "NCHW"))
    y = y + bias.reshape(1, -1, 1, 1)
    mean = jnp.mean(y, axis=(0, 2, 3), keepdims=True)
    var = jnp.mean((y - mean) ** 2, axis=(0, 2, 3), keepdims=True)
    z = (y - mean) * jax.lax.rsqrt(var + eps)
    z = z * gamma.reshape(1, -1, 1, 1) + beta.reshape(1, -1, 1, 1)
    return jnp.where(z >= 0, z, neg_slope * z)


if __name__ == "__main__":
    # Small shapes consistent with the module: batch=2, Cin=4, H=W=16 -> Ho=Wo=8, Cout=8.
    N, Cin, Cout, H, W = 2, 4, 8, 16, 16
    KH = KW = 4

    key = jax.random.PRNGKey(0)
    kx, kw_, kb, kg, kbt = jax.random.split(key, 5)
    x = jax.random.normal(kx, (N, Cin, H, W), dtype=jnp.float32)
    weight = 0.1 * jax.random.normal(kw_, (Cout, Cin, KH, KW), dtype=jnp.float32)
    bias = 0.1 * jax.random.normal(kb, (Cout,), dtype=jnp.float32)
    gamma = 1.0 + 0.1 * jax.random.normal(kg, (Cout,), dtype=jnp.float32)
    beta = 0.1 * jax.random.normal(kbt, (Cout,), dtype=jnp.float32)

    out = jax.block_until_ready(cbl_forward(x, weight, bias, gamma, beta))
    ref = jax.block_until_ready(cbl_reference(x, weight, bias, gamma, beta))

    assert out.shape == (N, Cout, H // 2, W // 2), out.shape
    # bf16 MXU operands + bf16 intermediate y (f32 accumulation/stats) -> loosened tolerance.
    assert jnp.allclose(out, ref, atol=4e-2, rtol=4e-2), float(jnp.max(jnp.abs(out - ref)))

    print("KERNEL_OK")
</pallas_src>

<mosaic_0001>
module attributes {stable_mosaic.version = 11 : i64} {
  func.func @bn_lrelu_kernel(%arg0: i32, %arg1: i32, %arg2: memref<1x128xf32, #tpu.memory_space<vmem>>, %arg3: memref<1x128xf32, #tpu.memory_space<vmem>>, %arg4: memref<128x128xbf16, #tpu.memory_space<vmem>>, %arg5: memref<128x128xf32, #tpu.memory_space<vmem>>) attributes {dimension_semantics = [#tpu.dimension_semantics<parallel>, #tpu.dimension_semantics<parallel>], iteration_bounds = array<i64: 1, 1>, scalar_prefetch = 0 : i64, scratch_operands = 0 : i64, tpu.core_type = #tpu.core_type<tc>, window_params = [{transform_indices = @transform_0, window_bounds = array<i64: 1, 128>}, {transform_indices = @transform_1, window_bounds = array<i64: 1, 128>}, {transform_indices = @transform_2, window_bounds = array<i64: 128, 128>}, {transform_indices = @transform_3, window_bounds = array<i64: 128, 128>}]} {
    %c0 = arith.constant 0 : index
    %c0_0 = arith.constant 0 : index
    %0 = vector.load %arg4[%c0, %c0_0] : memref<128x128xbf16, #tpu.memory_space<vmem>>, vector<128x128xbf16>
    %1 = arith.extf %0 : vector<128x128xbf16> to vector<128x128xf32>
    %c0_1 = arith.constant 0 : index
    %c0_2 = arith.constant 0 : index
    %2 = vector.load %arg2[%c0_1, %c0_2] : memref<1x128xf32, #tpu.memory_space<vmem>>, vector<1x128xf32>
    %3 = vector.broadcast %2 : vector<1x128xf32> to vector<128x128xf32>
    %4 = arith.mulf %1, %3 : vector<128x128xf32>
    %c0_3 = arith.constant 0 : index
    %c0_4 = arith.constant 0 : index
    %5 = vector.load %arg3[%c0_3, %c0_4] : memref<1x128xf32, #tpu.memory_space<vmem>>, vector<1x128xf32>
    %6 = vector.broadcast %5 : vector<1x128xf32> to vector<128x128xf32>
    %7 = arith.addf %4, %6 : vector<128x128xf32>
    %cst = arith.constant 0.000000e+00 : f32
    %8 = vector.broadcast %cst : f32 to vector<128x128xf32>
    %9 = arith.cmpf oge, %7, %8 : vector<128x128xf32>
    %cst_5 = arith.constant 2.000000e-01 : f32
    %10 = vector.broadcast %cst_5 : f32 to vector<128x128xf32>
    %11 = arith.mulf %10, %7 : vector<128x128xf32>
    %12 = arith.select %9, %7, %11 : vector<128x128xi1>, vector<128x128xf32>
    %c0_6 = arith.constant 0 : index
    %c0_7 = arith.constant 0 : index
    %13 = vector.load %arg5[%c0_6, %c0_7] : memref<128x128xf32, #tpu.memory_space<vmem>>, vector<128x128xf32>
    tpu.vector_store %arg5[%c0_6, %c0_7], %12 {strides = array<i32>} : memref<128x128xf32, #tpu.memory_space<vmem>>, vector<128x128xf32>,
    return
  }
  func.func @transform_0(%arg0: i32, %arg1: i32) -> (i32, i32) {
    %c0_i32 = arith.constant 0 : i32
    %c0_i32_0 = arith.constant 0 : i32
    return %c0_i32, %arg0 : i32, i32
  }
  func.func @transform_1(%arg0: i32, %arg1: i32) -> (i32, i32) {
    %c0_i32 = arith.constant 0 : i32
    %c0_i32_0 = arith.constant 0 : i32
    return %c0_i32, %arg0 : i32, i32
  }
  func.func @transform_2(%arg0: i32, %arg1: i32) -> (i32, i32) {
    %c0_i32 = arith.constant 0 : i32
    return %arg1, %arg0 : i32, i32
  }
  func.func @transform_3(%arg0: i32, %arg1: i32) -> (i32, i32) {
    %c0_i32 = arith.constant 0 : i32
    return %arg1, %arg0 : i32, i32
  }
}

module attributes {stable_mosaic.version = 11 : i64} {
  func.func @conv_stats_kernel(%arg0: i32, %arg1: i32, %arg2: i32, %arg3: memref<128x128xbf16, #tpu.memory_space<vmem>>, %arg4: memref<128x128xbf16, #tpu.memory_space<vmem>>, %arg5: memref<128x128xbf16, #tpu.memory_space<vmem>>, %arg6: memref<1x1x128xf32, #tpu.memory_space<vmem>>, %arg7: memref<1x1x128xf32, #tpu.memory_space<vmem>>, %arg8: memref<128x128xf32, #tpu.memory_space<vmem>>) attributes {dimension_semantics = [#tpu.dimension_semantics<parallel>, #tpu.dimension_semantics<parallel>, #tpu.dimension_semantics<arbitrary>], iteration_bounds = array<i64: 1, 1, 1>, scalar_prefetch = 0 : i64, scratch_operands = 1 : i64, tpu.core_type = #tpu.core_type<tc>, window_params = [{transform_indices = @transform_0, window_bounds = array<i64: 128, 128>}, {transform_indices = @transform_1, window_bounds = array<i64: 128, 128>}, {transform_indices = @transform_2, window_bounds = array<i64: 128, 128>}, {transform_indices = @transform_3, window_bounds = array<i64: 1, 1, 128>}, {transform_indices = @transform_4, window_bounds = array<i64: 1, 1, 128>}]} {
    %c0_i32 = arith.constant 0 : i32
    %0 = arith.cmpi eq, %arg2, %c0_i32 : i32
    %1 = arith.extui %0 : i1 to i32
    %c0_i32_0 = arith.constant 0 : i32
    %2 = arith.cmpi ne, %1, %c0_i32_0 : i32
    scf.if %2 {
      %cst_9 = arith.constant 0.000000e+00 : f32
      %15 = vector.broadcast %cst_9 : f32 to vector<128x128xf32>
      %c0_10 = arith.constant 0 : index
      %c0_11 = arith.constant 0 : index
      %16 = vector.load %arg8[%c0_10, %c0_11] : memref<128x128xf32, #tpu.memory_space<vmem>>, vector<128x128xf32>
      tpu.vector_store %arg8[%c0_10, %c0_11], %15 {strides = array<i32>} : memref<128x128xf32, #tpu.memory_space<vmem>>, vector<128x128xf32>,
    } else {
    }
    %c128_i32 = arith.constant 128 : i32
    %3 = arith.muli %arg2, %c128_i32 : i32
    %4 = tpu.assume_multiple %3, 128 : i32
    %5 = arith.index_cast %4 : i32 to index
    %c0 = arith.constant 0 : index
    %6 = vector.load %arg4[%5, %c0] : memref<128x128xbf16, #tpu.memory_space<vmem>>, vector<128x128xbf16>
    %c0_1 = arith.constant 0 : index
    %c0_2 = arith.constant 0 : index
    %7 = vector.load %arg8[%c0_1, %c0_2] : memref<128x128xf32, #tpu.memory_space<vmem>>, vector<128x128xf32>
    %c0_3 = arith.constant 0 : index
    %c0_4 = arith.constant 0 : index
    %8 = vector.load %arg3[%c0_3, %c0_4] : memref<128x128xbf16, #tpu.memory_space<vmem>>, vector<128x128xbf16>
    %cst = arith.constant dense<0.000000e+00> : vector<128x128xf32>
    %9 = tpu.matmul %8, %6, %cst {dimension_numbers = #tpu.dot_dimension_numbers<[1], [0], [0], [1], [0, 0, 1, 1], [], []>} : vector<128x128xbf16>, vector<128x128xbf16>, vector<128x128xf32> -> vector<128x128xf32>
    %10 = arith.addf %7, %9 : vector<128x128xf32>
    %c0_5 = arith.constant 0 : index
    %c0_6 = arith.constant 0 : index
    %11 = vector.load %arg8[%c0_5, %c0_6] : memref<128x128xf32, #tpu.memory_space<vmem>>, vector<128x128xf32>
    tpu.vector_store %arg8[%c0_5, %c0_6], %10 {strides = array<i32>} : memref<128x128xf32, #tpu.memory_space<vmem>>, vector<128x128xf32>,
    %c0_i32_7 = arith.constant 0 : i32
    %12 = arith.cmpi eq, %arg2, %c0_i32_7 : i32
    %13 = arith.extui %12 : i1 to i32
    %c0_i32_8 = arith.constant 0 : i32
    %14 = arith.cmpi ne, %13, %c0_i32_8 : i32
    scf.if %14 {
      %c0_9 = arith.constant 0 : index
      %c0_10 = arith.constant 0 : index
      %15 = vector.load %arg8[%c0_9, %c0_10] : memref<128x128xf32, #tpu.memory_space<vmem>>, vector<128x128xf32>
      %16 = arith.truncf %15 : vector<128x128xf32> to vector<128x128xbf16>
      %c0_11 = arith.constant 0 : index
      %c0_12 = arith.constant 0 : index
      %17 = vector.load %arg5[%c0_11, %c0_12] : memref<128x128xbf16, #tpu.memory_space<vmem>>, vector<128x128xbf16>
      tpu.vector_store %arg5[%c0_11, %c0_12], %16 {strides = array<i32>} : memref<128x128xbf16, #tpu.memory_space<vmem>>, vector<128x128xbf16>,
      %cst_13 = arith.constant dense<0.000000e+00> : vector<128xf32>
      %18 = vector.multi_reduction <add>, %15, %cst_13 [0] : vector<128x128xf32> to vector<128xf32>
      %19 = vector.shape_cast %18 : vector<128xf32> to vector<1x128xf32>
      %20 = vector.shape_cast %19 : vector<1x128xf32> to vector<1x1x128xf32>
      %c0_14 = arith.constant 0 : index
      %c0_15 = arith.constant 0 : index
      %c0_16 = arith.constant 0 : index
      %21 = vector.load %arg6[%c0_14, %c0_15, %c0_16] : memref<1x1x128xf32, #tpu.memory_space<vmem>>, vector<1x1x128xf32>
      tpu.vector_store %arg6[%c0_14, %c0_15, %c0_16], %20 {strides = array<i32>} : memref<1x1x128xf32, #tpu.memory_space<vmem>>, vector<1x1x128xf32>,
      %22 = arith.mulf %15, %15 : vector<128x128xf32>
      %cst_17 = arith.constant dense<0.000000e+00> : vector<128xf32>
      %23 = vector.multi_reduction <add>, %22, %cst_17 [0] : vector<128x128xf32> to vector<128xf32>
      %24 = vector.shape_cast %23 : vector<128xf32> to vector<1x128xf32>
      %25 = vector.shape_cast %24 : vector<1x128xf32> to vector<1x1x128xf32>
      %c0_18 = arith.constant 0 : index
      %c0_19 = arith.constant 0 : index
      %c0_20 = arith.constant 0 : index
      %26 = vector.load %arg7[%c0_18, %c0_19, %c0_20] : memref<1x1x128xf32, #tpu.memory_space<vmem>>, vector<1x1x128xf32>
      tpu.vector_store %arg7[%c0_18, %c0_19, %c0_20], %25 {strides = array<i32>} : memref<1x1x128xf32, #tpu.memory_space<vmem>>, vector<1x1x128xf32>,
    } else {
    }
    return
  }
  func.func @transform_0(%arg0: i32, %arg1: i32, %arg2: i32) -> (i32, i32) {
    %c0_i32 = arith.constant 0 : i32
    return %arg1, %arg2 : i32, i32
  }
  func.func @transform_1(%arg0: i32, %arg1: i32, %arg2: i32) -> (i32, i32) {
    %c0_i32 = arith.constant 0 : i32
    %c0_i32_0 = arith.constant 0 : i32
    return %c0_i32, %arg0 : i32, i32
  }
  func.func @transform_2(%arg0: i32, %arg1: i32, %arg2: i32) -> (i32, i32) {
    %c0_i32 = arith.constant 0 : i32
    return %arg1, %arg0 : i32, i32
  }
  func.func @transform_3(%arg0: i32, %arg1: i32, %arg2: i32) -> (i32, i32, i32) {
    %c0_i32 = arith.constant 0 : i32
    %c0_i32_0 = arith.constant 0 : i32
    return %arg1, %c0_i32, %arg0 : i32, i32, i32
  }
  func.func @transform_4(%arg0: i32, %arg1: i32, %arg2: i32) -> (i32, i32, i32) {
    %c0_i32 = arith.constant 0 : i32
    %c0_i32_0 = arith.constant 0 : i32
    return %arg1, %c0_i32, %arg0 : i32, i32, i32
  }
}

</mosaic_0001>

<llo_original>
// kernel: cbl_forward.3
$region0: #{cbl_forward.3}
  #allocation0 [shape = 'u32[]', space=smem, size = 0x4, offset = 0x4, fixed_abs, tag = 'smem constant byte address 0x4 - core index']
  #allocation1 [shape = 'u32[144,128]{1,0:T(1,128)}', space=vmem, size = 0x12000, scoped, tag = 'internal scratch']
  %s0 = inlined_call_operand.vmem [shape: f32[1,128], index: 0, kind: input, shape index: {}]
  %s1 = inlined_call_operand.vmem [shape: f32[1,128], index: 1, kind: input, shape index: {}]
  %s2 = inlined_call_operand.vmem [shape: bf16[128,128], index: 2, kind: input, shape index: {}]
  %s3 = inlined_call_operand.vmem [shape: f32[128,128], index: 3, kind: output, shape index: {}]
  %s4 = sld [smem:[#allocation0]]
  $region22: #{cbl_forward.3} parent=0
    _
  %s6 = ssub.s32 1, %s4
  %s7 = scalar_select 0, %s6, %s4
  // Predicated region
  $region2: #{cbl_forward.3} parent=0 // pred_check
    _
  $region3: #{cbl_forward.3} parent=0 // pred_check_branch
    %9 = sbr.rel (0) target = $region5
  $region4: #{cbl_forward.3} parent=0 // pred_region
    _
  $region5: #{cbl_forward.3} parent=0 // pred_fallthru
    _
  // Predicated region
  $region6: #{cbl_forward.3} parent=0 // pred_check
    _
  $region7: #{cbl_forward.3} parent=0 // pred_check_branch
    %11 = sbr.rel (0) target = $region9
  $region8: #{cbl_forward.3} parent=0 // pred_region
    _
  $region9: #{cbl_forward.3} parent=0 // pred_fallthru
    _
  // Predicated region
  $region10: #{cbl_forward.3} parent=0 // pred_check
    _
  $region11: #{cbl_forward.3} parent=0 // pred_check_branch
    %13 = sbr.rel (0) target = $region13
  $region12: #{cbl_forward.3} parent=0 // pred_region
    _
  $region13: #{cbl_forward.3} parent=0 // pred_fallthru
    _
  %v14 = vld [vmem:[%s2] sm:$0xf]
  %v15 = vld [vmem:[%s2 + $0x4] sm:$0xf]
  %v16 = vld [vmem:[%s2 + $0x8] sm:$0xf]
  %v17 = vld [vmem:[%s2 + $0xc] sm:$0xf]
  %v18 = vld [vmem:[%s2 + $0x10] sm:$0xf]
  %v19 = vld [vmem:[%s2 + $0x14] sm:$0xf]
  %v20 = vld [vmem:[%s2 + $0x18] sm:$0xf]
  %v21 = vld [vmem:[%s2 + $0x1c] sm:$0xf]
  %v22 = vld [vmem:[%s2 + $0x20] sm:$0xf]
  %v23 = vld [vmem:[%s2 + $0x24] sm:$0xf]
  %v24 = vld [vmem:[%s2 + $0x28] sm:$0xf]
  %v25 = vld [vmem:[%s2 + $0x2c] sm:$0xf]
  %v26 = vld [vmem:[%s2 + $0x30] sm:$0xf]
  %v27 = vld [vmem:[%s2 + $0x34] sm:$0xf]
  %v28 = vld [vmem:[%s2 + $0x38] sm:$0xf]
  %v29 = vld [vmem:[%s2 + $0x3c] sm:$0xf]
  %v30 = vunpack.c.l.bf16 %v14
  %v31 = vunpack.c.l.bf16 %v15
  %v32 = vunpack.c.l.bf16 %v16
  %v33 = vunpack.c.l.bf16 %v17
  %v34 = vunpack.c.l.bf16 %v18
  %v35 = vunpack.c.l.bf16 %v19
  %v36 = vunpack.c.l.bf16 %v20
  %v37 = vunpack.c.l.bf16 %v21
  %v38 = vunpack.c.l.bf16 %v22
  %v39 = vunpack.c.l.bf16 %v23
  %v40 = vunpack.c.l.bf16 %v24
  %v41 = vunpack.c.l.bf16 %v25
  %v42 = vunpack.c.l.bf16 %v26
  %v43 = vunpack.c.l.bf16 %v27
  %v44 = vunpack.c.l.bf16 %v28
  %v45 = vunpack.c.l.bf16 %v29
  %v46 = vld [vmem:[%s0] sm:$0x1]
  %v48 = vlaneseq
  %v49 = vshrl.u32 %v48, 7
  %v50 = vsub.s32 0, %v49
  %v51 = vrot.slane %v46, %v50
  %v53 = vmul.f32 %v30, %v51
  %v54 = vmul.f32 %v31, %v51
  %v55 = vmul.f32 %v32, %v51
  %v56 = vmul.f32 %v33, %v51
  %v57 = vmul.f32 %v34, %v51
  %v58 = vmul.f32 %v35, %v51
  %v59 = vmul.f32 %v36, %v51
  %v60 = vmul.f32 %v37, %v51
  %v61 = vmul.f32 %v38, %v51
  %v62 = vmul.f32 %v39, %v51
  %v63 = vmul.f32 %v40, %v51
  %v64 = vmul.f32 %v41, %v51
  %v65 = vmul.f32 %v42, %v51
  %v66 = vmul.f32 %v43, %v51
  %v67 = vmul.f32 %v44, %v51
  %v68 = vmul.f32 %v45, %v51
  %v69 = vld [vmem:[%s1] sm:$0x1]
  %v71 = vlaneseq
  %v72 = vshrl.u32 %v71, 7
  %v73 = vsub.s32 0, %v72
  %v74 = vrot.slane %v69, %v73
  %v76 = vadd.f32 %v53, %v74
  %v77 = vadd.f32 %v54, %v74
  %v78 = vadd.f32 %v55, %v74
  %v79 = vadd.f32 %v56, %v74
  %v80 = vadd.f32 %v57, %v74
  %v81 = vadd.f32 %v58, %v74
  %v82 = vadd.f32 %v59, %v74
  %v83 = vadd.f32 %v60, %v74
  %v84 = vadd.f32 %v61, %v74
  %v85 = vadd.f32 %v62, %v74
  %v86 = vadd.f32 %v63, %v74
  %v87 = vadd.f32 %v64, %v74
  %v88 = vadd.f32 %v65, %v74
  %v89 = vadd.f32 %v66, %v74
  %v90 = vadd.f32 %v67, %v74
  %v91 = vadd.f32 %v68, %v74
  %vm92 = vcmp.ge.f32.partialorder %v76, 0.0
  %vm93 = vcmp.ge.f32.partialorder %v77, 0.0
  %vm94 = vcmp.ge.f32.partialorder %v78, 0.0
  %vm95 = vcmp.ge.f32.partialorder %v79, 0.0
  %vm96 = vcmp.ge.f32.partialorder %v80, 0.0
  %vm97 = vcmp.ge.f32.partialorder %v81, 0.0
  %vm98 = vcmp.ge.f32.partialorder %v82, 0.0
  %vm99 = vcmp.ge.f32.partialorder %v83, 0.0
  %vm100 = vcmp.ge.f32.partialorder %v84, 0.0
  %vm101 = vcmp.ge.f32.partialorder %v85, 0.0
  %vm102 = vcmp.ge.f32.partialorder %v86, 0.0
  %vm103 = vcmp.ge.f32.partialorder %v87, 0.0
  %vm104 = vcmp.ge.f32.partialorder %v88, 0.0
  %vm105 = vcmp.ge.f32.partialorder %v89, 0.0
  %vm106 = vcmp.ge.f32.partialorder %v90, 0.0
  %vm107 = vcmp.ge.f32.partialorder %v91, 0.0
  %v108 = vmul.f32 %v76, 0.2
  %v109 = vmul.f32 %v77, 0.2
  %v110 = vmul.f32 %v78, 0.2
  %v111 = vmul.f32 %v79, 0.2
  %v112 = vmul.f32 %v80, 0.2
  %v113 = vmul.f32 %v81, 0.2
  %v114 = vmul.f32 %v82, 0.2
  %v115 = vmul.f32 %v83, 0.2
  %v116 = vmul.f32 %v84, 0.2
  %v117 = vmul.f32 %v85, 0.2
  %v118 = vmul.f32 %v86, 0.2
  %v119 = vmul.f32 %v87, 0.2
  %v120 = vmul.f32 %v88, 0.2
  %v121 = vmul.f32 %v89, 0.2
  %v122 = vmul.f32 %v90, 0.2
  %v123 = vmul.f32 %v91, 0.2
  %v124 = vsel %vm92, %v76, %v108
  %v125 = vsel %vm93, %v77, %v109
  %v126 = vsel %vm94, %v78, %v110
  %v127 = vsel %vm95, %v79, %v111
  %v128 = vsel %vm96, %v80, %v112
  %v129 = vsel %vm97, %v81, %v113
  %v130 = vsel %vm98, %v82, %v114
  %v131 = vsel %vm99, %v83, %v115
  %v132 = vsel %vm100, %v84, %v116
  %v133 = vsel %vm101, %v85, %v117
  %v134 = vsel %vm102, %v86, %v118
  %v135 = vsel %vm103, %v87, %v119
  %v136 = vsel %vm104, %v88, %v120
  %v137 = vsel %vm105, %v89, %v121
  %v138 = vsel %vm106, %v90, %v122
  %v139 = vsel %vm107, %v91, %v123
  %140 = vst [vmem:[%s3] sm:$0xff] %v124
  %141 = vst [vmem:[%s3 + $0x8] sm:$0xff] %v125
  %142 = vst [vmem:[%s3 + $0x10] sm:$0xff] %v126
  %143 = vst [vmem:[%s3 + $0x18] sm:$0xff] %v127
  %144 = vst [vmem:[%s3 + $0x20] sm:$0xff] %v128
  %145 = vst [vmem:[%s3 + $0x28] sm:$0xff] %v129
  %146 = vst [vmem:[%s3 + $0x30] sm:$0xff] %v130
  %147 = vst [vmem:[%s3 + $0x38] sm:$0xff] %v131
  %148 = vst [vmem:[%s3 + $0x40] sm:$0xff] %v132
  %149 = vst [vmem:[%s3 + $0x48] sm:$0xff] %v133
  %150 = vst [vmem:[%s3 + $0x50] sm:$0xff] %v134
  %151 = vst [vmem:[%s3 + $0x58] sm:$0xff] %v135
  %152 = vst [vmem:[%s3 + $0x60] sm:$0xff] %v136
  %153 = vst [vmem:[%s3 + $0x68] sm:$0xff] %v137
  %154 = vst [vmem:[%s3 + $0x70] sm:$0xff] %v138
  %155 = vst [vmem:[%s3 + $0x78] sm:$0xff] %v139
  // Predicated region
  $region14: #{cbl_forward.3} parent=0 // pred_check
    _
  $region15: #{cbl_forward.3} parent=0 // pred_check_branch
    %157 = sbr.rel (0) target = $region17
  $region16: #{cbl_forward.3} parent=0 // pred_region
    _
  $region17: #{cbl_forward.3} parent=0 // pred_fallthru
    _
  // Predicated region
  $region18: #{cbl_forward.3} parent=0 // pred_check
    _
  $region19: #{cbl_forward.3} parent=0 // pred_check_branch
    %159 = sbr.rel (0) target = $region21
  $region20: #{cbl_forward.3} parent=0 // pred_region
    _
  $region21: #{cbl_forward.3} parent=0 // pred_fallthru
    _

// kernel: cbl_forward.2
$region0: #{cbl_forward.2}
  #allocation0 [shape = 'u32[]', space=smem, size = 0x4, offset = 0x4, fixed_abs, tag = 'smem constant byte address 0x4 - core index']
  #allocation1 [shape = 'u32[144,128]{1,0:T(1,128)}', space=vmem, size = 0x12000, scoped, tag = 'internal scratch']
  #allocation2 [shape = 'f32[128,128]{1,0:T(8,128)}', space=vmem, size = 0x10000, scoped, tag = 'scratch operand']
  %s0 = inlined_call_operand.vmem [shape: bf16[128,128], index: 0, kind: input, shape index: {}]
  %s1 = inlined_call_operand.vmem [shape: bf16[128,128], index: 1, kind: input, shape index: {}]
  %s2 = inlined_call_operand.vmem [shape: bf16[128,128], index: 2, kind: output, shape index: {0}]
  %s3 = inlined_call_operand.vmem [shape: f32[1,1,128], index: 3, kind: output, shape index: {1}]
  %s4 = inlined_call_operand.vmem [shape: f32[1,1,128], index: 4, kind: output, shape index: {2}]
  %5 = xla_tuple %s2, %s3, %s4
  %s6 = sld [smem:[#allocation0]]
  $region42: #{cbl_forward.2} parent=0
    _
  %s8 = ssub.s32 1, %s6
  %s9 = scalar_select 0, %s8, %s6
  // Predicated region
  $region2: #{cbl_forward.2} parent=0 // pred_check
    _
  $region3: #{cbl_forward.2} parent=0 // pred_check_branch
    %11 = sbr.rel (0) target = $region5
  $region4: #{cbl_forward.2} parent=0 // pred_region
    _
  $region5: #{cbl_forward.2} parent=0 // pred_fallthru
    _
  // Predicated region
  $region6: #{cbl_forward.2} parent=0 // pred_check
    _
  $region7: #{cbl_forward.2} parent=0 // pred_check_branch
    %13 = sbr.rel (0) target = $region9
  $region8: #{cbl_forward.2} parent=0 // pred_region
    _
  $region9: #{cbl_forward.2} parent=0 // pred_fallthru
    _
  %p15 = scmp.eq.s32.totalorder 0, 0
  // Predicated region
  $region10: #{cbl_forward.2} parent=0 // pred_check
    %p16 = pneg %p15
  $region11: #{cbl_forward.2} parent=0 // pred_check_branch
    %18 = sbr.rel (%p16) target = $region13
  $region12: #{cbl_forward.2} parent=0 // pred_region
    %19 = vst [vmem:[#allocation2] sm:$0xff] 0.0
    %20 = vst [vmem:[#allocation2 + $0x8] sm:$0xff] 0.0
    %21 = vst [vmem:[#allocation2 + $0x10] sm:$0xff] 0.0
    %22 = vst [vmem:[#allocation2 + $0x18] sm:$0xff] 0.0
    %23 = vst [vmem:[#allocation2 + $0x20] sm:$0xff] 0.0
    %24 = vst [vmem:[#allocation2 + $0x28] sm:$0xff] 0.0
    %25 = vst [vmem:[#allocation2 + $0x30] sm:$0xff] 0.0
    %26 = vst [vmem:[#allocation2 + $0x38] sm:$0xff] 0.0
    %27 = vst [vmem:[#allocation2 + $0x40] sm:$0xff] 0.0
    %28 = vst [vmem:[#allocation2 + $0x48] sm:$0xff] 0.0
    %29 = vst [vmem:[#allocation2 + $0x50] sm:$0xff] 0.0
    %30 = vst [vmem:[#allocation2 + $0x58] sm:$0xff] 0.0
    %31 = vst [vmem:[#allocation2 + $0x60] sm:$0xff] 0.0
    %32 = vst [vmem:[#allocation2 + $0x68] sm:$0xff] 0.0
    %33 = vst [vmem:[#allocation2 + $0x70] sm:$0xff] 0.0
    %34 = vst [vmem:[#allocation2 + $0x78] sm:$0xff] 0.0
  $region13: #{cbl_forward.2} parent=0 // pred_fallthru
    _
  %s35 = smul.u32 0, 128
  %s36 = sshra.s32 %s35, 3
  %s37 = sand.u32 %s35, 7
  %s38 = smul.addr %s36, 4
  %s39 = scalar_lea.vmem %s1, %s38
  %v40 = vld [vmem:[%s39] sm:$0xf]
  %v41 = vld [vmem:[%s39 + $0x4] sm:$0xf]
  %v42 = vld [vmem:[%s39 + $0x8] sm:$0xf]
  %v43 = vld [vmem:[%s39 + $0xc] sm:$0xf]
  %v44 = vld [vmem:[%s39 + $0x10] sm:$0xf]
  %v45 = vld [vmem:[%s39 + $0x14] sm:$0xf]
  %v46 = vld [vmem:[%s39 + $0x18] sm:$0xf]
  %v47 = vld [vmem:[%s39 + $0x1c] sm:$0xf]
  %v48 = vld [vmem:[%s39 + $0x20] sm:$0xf]
  %v49 = vld [vmem:[%s39 + $0x24] sm:$0xf]
  %v50 = vld [vmem:[%s39 + $0x28] sm:$0xf]
  %v51 = vld [vmem:[%s39 + $0x2c] sm:$0xf]
  %v52 = vld [vmem:[%s39 + $0x30] sm:$0xf]
  %v53 = vld [vmem:[%s39 + $0x34] sm:$0xf]
  %v54 = vld [vmem:[%s39 + $0x38] sm:$0xf]
  %v55 = vld [vmem:[%s39 + $0x3c] sm:$0xf]
  %v56 = vld [vmem:[#allocation2] sm:$0xff]
  %v57 = vld [vmem:[#allocation2 + $0x8] sm:$0xff]
  %v58 = vld [vmem:[#allocation2 + $0x10] sm:$0xff]
  %v59 = vld [vmem:[#allocation2 + $0x18] sm:$0xff]
  %v60 = vld [vmem:[#allocation2 + $0x20] sm:$0xff]
  %v61 = vld [vmem:[#allocation2 + $0x28] sm:$0xff]
  %v62 = vld [vmem:[#allocation2 + $0x30] sm:$0xff]
  %v63 = vld [vmem:[#allocation2 + $0x38] sm:$0xff]
  %v64 = vld [vmem:[#allocation2 + $0x40] sm:$0xff]
  %v65 = vld [vmem:[#allocation2 + $0x48] sm:$0xff]
  %v66 = vld [vmem:[#allocation2 + $0x50] sm:$0xff]
  %v67 = vld [vmem:[#allocation2 + $0x58] sm:$0xff]
  %v68 = vld [vmem:[#allocation2 + $0x60] sm:$0xff]
  %v69 = vld [vmem:[#allocation2 + $0x68] sm:$0xff]
  %v70 = vld [vmem:[#allocation2 + $0x70] sm:$0xff]
  %v71 = vld [vmem:[#allocation2 + $0x78] sm:$0xff]
  %v72 = vld [vmem:[%s0] sm:$0xf]
  %v73 = vld [vmem:[%s0 + $0x4] sm:$0xf]
  %v74 = vld [vmem:[%s0 + $0x8] sm:$0xf]
  %v75 = vld [vmem:[%s0 + $0xc] sm:$0xf]
  %v76 = vld [vmem:[%s0 + $0x10] sm:$0xf]
  %v77 = vld [vmem:[%s0 + $0x14] sm:$0xf]
  %v78 = vld [vmem:[%s0 + $0x18] sm:$0xf]
  %v79 = vld [vmem:[%s0 + $0x1c] sm:$0xf]
  %v80 = vld [vmem:[%s0 + $0x20] sm:$0xf]
  %v81 = vld [vmem:[%s0 + $0x24] sm:$0xf]
  %v82 = vld [vmem:[%s0 + $0x28] sm:$0xf]
  %v83 = vld [vmem:[%s0 + $0x2c] sm:$0xf]
  %v84 = vld [vmem:[%s0 + $0x30] sm:$0xf]
  %v85 = vld [vmem:[%s0 + $0x34] sm:$0xf]
  %v86 = vld [vmem:[%s0 + $0x38] sm:$0xf]
  %v87 = vld [vmem:[%s0 + $0x3c] sm:$0xf]
  %v104 = vunpack.c.l.b16 %v72
  %v105 = vunpack.c.l.b16 %v73
  %v106 = vunpack.c.l.b16 %v74
  %v107 = vunpack.c.l.b16 %v75
  %v108 = vunpack.c.l.b16 %v76
  %v109 = vunpack.c.l.b16 %v77
  %v110 = vunpack.c.l.b16 %v78
  %v111 = vunpack.c.l.b16 %v79
  %v112 = vunpack.c.l.b16 %v80
  %v113 = vunpack.c.l.b16 %v81
  %v114 = vunpack.c.l.b16 %v82
  %v115 = vunpack.c.l.b16 %v83
  %v116 = vunpack.c.l.b16 %v84
  %v117 = vunpack.c.l.b16 %v85
  %v118 = vunpack.c.l.b16 %v86
  %v119 = vunpack.c.l.b16 %v87
  %v120 = vpack.c.b16 %v105, %v104
  %v121 = vpack.c.b16 %v107, %v106
  %v122 = vpack.c.b16 %v109, %v108
  %v123 = vpack.c.b16 %v111, %v110
  %v124 = vpack.c.b16 %v113, %v112
  %v125 = vpack.c.b16 %v115, %v114
  %v126 = vpack.c.b16 %v117, %v116
  %v127 = vpack.c.b16 %v119, %v118
  %v152 = vunpack.c.l.b16 %v40
  %v153 = vunpack.c.l.b16 %v41
  %v154 = vunpack.c.l.b16 %v42
  %v155 = vunpack.c.l.b16 %v43
  %v156 = vunpack.c.l.b16 %v44
  %v157 = vunpack.c.l.b16 %v45
  %v158 = vunpack.c.l.b16 %v46
  %v159 = vunpack.c.l.b16 %v47
  %v160 = vunpack.c.l.b16 %v48
  %v161 = vunpack.c.l.b16 %v49
  %v162 = vunpack.c.l.b16 %v50
  %v163 = vunpack.c.l.b16 %v51
  %v164 = vunpack.c.l.b16 %v52
  %v165 = vunpack.c.l.b16 %v53
  %v166 = vunpack.c.l.b16 %v54
  %v167 = vunpack.c.l.b16 %v55
  %v168 = vpack.c.b16 %v153, %v152
  %v169 = vpack.c.b16 %v155, %v154
  %v170 = vpack.c.b16 %v157, %v156
  %v171 = vpack.c.b16 %v159, %v158
  %v172 = vpack.c.b16 %v161, %v160
  %v173 = vpack.c.b16 %v163, %v162
  %v174 = vpack.c.b16 %v165, %v164
  %v175 = vpack.c.b16 %v167, %v166
  %184 = vmatprep.subr.bf16.mxu0 0
  %185 = vmatpush1.bf16.msra.mxu0 %v175
  %186 = vmatprep.subr.bf16.mxu0 0
  %187 = vmatpush1.bf16.msra.mxu0 %v174
  %188 = vmatprep.subr.bf16.mxu0 0
  %189 = vmatpush1.bf16.msra.mxu0 %v173
  %190 = vmatprep.subr.bf16.mxu0 0
  %191 = vmatpush1.bf16.msra.mxu0 %v172
  %192 = vmatprep.subr.bf16.mxu0 0
  %193 = vmatpush1.bf16.msra.mxu0 %v171
  %194 = vmatprep.subr.bf16.mxu0 0
  %195 = vmatpush1.bf16.msra.mxu0 %v170
  %196 = vmatprep.subr.bf16.mxu0 0
  %197 = vmatpush1.bf16.msra.mxu0 %v169
  %198 = vmatprep.subr.bf16.mxu0 0
  %199 = vmatpush1.bf16.msra.mxu0 %v168
  %200 = vmatprep.subr.bf16.mxu0 0
  %201 = vmatpush2.bf16.msra.mxu0 0
  %202 = vmatprep.subr.bf16.mxu0 0
  %203 = vmatpush2.bf16.msra.mxu0 0
  %204 = vmatprep.subr.bf16.mxu0 0
  %205 = vmatpush2.bf16.msra.mxu0 0
  %206 = vmatprep.subr.bf16.mxu0 0
  %207 = vmatpush2.bf16.msra.mxu0 0
  %208 = vmatprep.subr.bf16.mxu0 0
  %209 = vmatpush2.bf16.msra.mxu0 0
  %210 = vmatprep.subr.bf16.mxu0 0
  %211 = vmatpush2.bf16.msra.mxu0 0
  %212 = vmatprep.subr.bf16.mxu0 0
  %213 = vmatpush2.bf16.msra.mxu0 0
  %214 = vmatprep.subr.bf16.mxu0 0
  %215 = vmatpush2.bf16.msra.mxu0 0
  %216 = vmatprep.mubr.bf16.mxu0 0
  %217 = vmatmul.mubr.bf16.gmra.mxu0 %v120
  %v218 = vpop.f32.mrf.mxu0
  %v219 = vadd.f32 0.0, %v218
  %v220 = vpop.f32.mrf.mxu0
  %v221 = vpop.f32.mrf.mxu0
  %v222 = vadd.f32 0.0, %v221
  %v223 = vpop.f32.mrf.mxu0
  %224 = vmatprep.mubr.bf16.mxu0 0
  %225 = vmatmul.mubr.bf16.gmra.mxu0 %v121
  %v226 = vpop.f32.mrf.mxu0
  %v227 = vadd.f32 0.0, %v226
  %v228 = vpop.f32.mrf.mxu0
  %v229 = vpop.f32.mrf.mxu0
  %v230 = vadd.f32 0.0, %v229
  %v231 = vpop.f32.mrf.mxu0
  %232 = vmatprep.mubr.bf16.mxu0 0
  %233 = vmatmul.mubr.bf16.gmra.mxu0 %v122
  %v234 = vpop.f32.mrf.mxu0
  %v235 = vadd.f32 0.0, %v234
  %v236 = vpop.f32.mrf.mxu0
  %v237 = vpop.f32.mrf.mxu0
  %v238 = vadd.f32 0.0, %v237
  %v239 = vpop.f32.mrf.mxu0
  %240 = vmatprep.mubr.bf16.mxu0 0
  %241 = vmatmul.mubr.bf16.gmra.mxu0 %v123
  %v242 = vpop.f32.mrf.mxu0
  %v243 = vadd.f32 0.0, %v242
  %v244 = vpop.f32.mrf.mxu0
  %v245 = vpop.f32.mrf.mxu0
  %v246 = vadd.f32 0.0, %v245
  %v247 = vpop.f32.mrf.mxu0
  %248 = vmatprep.mubr.bf16.mxu0 0
  %249 = vmatmul.mubr.bf16.gmra.mxu0 %v124
  %v250 = vpop.f32.mrf.mxu0
  %v251 = vadd.f32 0.0, %v250
  %v252 = vpop.f32.mrf.mxu0
  %v253 = vpop.f32.mrf.mxu0
  %v254 = vadd.f32 0.0, %v253
  %v255 = vpop.f32.mrf.mxu0
  %256 = vmatprep.mubr.bf16.mxu0 0
  %257 = vmatmul.mubr.bf16.gmra.mxu0 %v125
  %v258 = vpop.f32.mrf.mxu0
  %v259 = vadd.f32 0.0, %v258
  %v260 = vpop.f32.mrf.mxu0
  %v261 = vpop.f32.mrf.mxu0
  %v262 = vadd.f32 0.0, %v261
  %v263 = vpop.f32.mrf.mxu0
  %264 = vmatprep.mubr.bf16.mxu0 0
  %265 = vmatmul.mubr.bf16.gmra.mxu0 %v126
  %v266 = vpop.f32.mrf.mxu0
  %v267 = vadd.f32 0.0, %v266
  %v268 = vpop.f32.mrf.mxu0
  %v269 = vpop.f32.mrf.mxu0
  %v270 = vadd.f32 0.0, %v269
  %v271 = vpop.f32.mrf.mxu0
  %272 = vmatprep.mubr.bf16.mxu0 0
  %273 = vmatmul.mubr.bf16.gmra.mxu0 %v127
  %v274 = vpop.f32.mrf.mxu0
  %v275 = vadd.f32 0.0, %v274
  %v276 = vpop.f32.mrf.mxu0
  %v277 = vpop.f32.mrf.mxu0
  %v278 = vadd.f32 0.0, %v277
  %v279 = vpop.f32.mrf.mxu0
  %280 = vdwg.mxu0
  %v281 = vadd.f32 %v56, %v219
  %v282 = vadd.f32 %v57, %v222
  %v283 = vadd.f32 %v58, %v227
  %v284 = vadd.f32 %v59, %v230
  %v285 = vadd.f32 %v60, %v235
  %v286 = vadd.f32 %v61, %v238
  %v287 = vadd.f32 %v62, %v243
  %v288 = vadd.f32 %v63, %v246
  %v289 = vadd.f32 %v64, %v251
  %v290 = vadd.f32 %v65, %v254
  %v291 = vadd.f32 %v66, %v259
  %v292 = vadd.f32 %v67, %v262
  %v293 = vadd.f32 %v68, %v267
  %v294 = vadd.f32 %v69, %v270
  %v295 = vadd.f32 %v70, %v275
  %v296 = vadd.f32 %v71, %v278
  %297 = vst [vmem:[#allocation2] sm:$0xff] %v281
  %298 = vst [vmem:[#allocation2 + $0x8] sm:$0xff] %v282
  %299 = vst [vmem:[#allocation2 + $0x10] sm:$0xff] %v283
  %300 = vst [vmem:[#allocation2 + $0x18] sm:$0xff] %v284
  %301 = vst [vmem:[#allocation2 + $0x20] sm:$0xff] %v285
  %302 = vst [vmem:[#allocation2 + $0x28] sm:$0xff] %v286
  %303 = vst [vmem:[#allocation2 + $0x30] sm:$0xff] %v287
  %304 = vst [vmem:[#allocation2 + $0x38] sm:$0xff] %v288
  %305 = vst [vmem:[#allocation2 + $0x40] sm:$0xff] %v289
  %306 = vst [vmem:[#allocation2 + $0x48] sm:$0xff] %v290
  %307 = vst [vmem:[#allocation2 + $0x50] sm:$0xff] %v291
  %308 = vst [vmem:[#allocation2 + $0x58] sm:$0xff] %v292
  %309 = vst [vmem:[#allocation2 + $0x60] sm:$0xff] %v293
  %310 = vst [vmem:[#allocation2 + $0x68] sm:$0xff] %v294
  %311 = vst [vmem:[#allocation2 + $0x70] sm:$0xff] %v295
  %312 = vst [vmem:[#allocation2 + $0x78] sm:$0xff] %v296
  // Predicated region
  $region14: #{cbl_forward.2} parent=0 // pred_check
    %p313 = pneg %p15
  $region15: #{cbl_forward.2} parent=0 // pred_check_branch
    %315 = sbr.rel (%p313) target = $region17
  $region16: #{cbl_forward.2} parent=0 // pred_region
    %v316 = vld [vmem:[#allocation2] sm:$0xff]
    %v317 = vld [vmem:[#allocation2 + $0x8] sm:$0xff]
    %v318 = vld [vmem:[#allocation2 + $0x10] sm:$0xff]
    %v319 = vld [vmem:[#allocation2 + $0x18] sm:$0xff]
    %v320 = vld [vmem:[#allocation2 + $0x20] sm:$0xff]
    %v321 = vld [vmem:[#allocation2 + $0x28] sm:$0xff]
    %v322 = vld [vmem:[#allocation2 + $0x30] sm:$0xff]
    %v323 = vld [vmem:[#allocation2 + $0x38] sm:$0xff]
    %v324 = vld [vmem:[#allocation2 + $0x40] sm:$0xff]
    %v325 = vld [vmem:[#allocation2 + $0x48] sm:$0xff]
    %v326 = vld [vmem:[#allocation2 + $0x50] sm:$0xff]
    %v327 = vld [vmem:[#allocation2 + $0x58] sm:$0xff]
    %v328 = vld [vmem:[#allocation2 + $0x60] sm:$0xff]
    %v329 = vld [vmem:[#allocation2 + $0x68] sm:$0xff]
    %v330 = vld [vmem:[#allocation2 + $0x70] sm:$0xff]
    %v331 = vld [vmem:[#allocation2 + $0x78] sm:$0xff]
    %v332 = vpack.c.bf16 %v317, %v316
    %v333 = vpack.c.bf16 %v319, %v318
    %v334 = vpack.c.bf16 %v321, %v320
    %v335 = vpack.c.bf16 %v323, %v322
    %v336 = vpack.c.bf16 %v325, %v324
    %v337 = vpack.c.bf16 %v327, %v326
    %v338 = vpack.c.bf16 %v329, %v328
    %v339 = vpack.c.bf16 %v331, %v330
    %v348 = vunpack.c.l.b16 %v332
    %v349 = vunpack.c.h.b16 %v332
    %v350 = vunpack.c.l.b16 %v333
    %v351 = vunpack.c.h.b16 %v333
    %v352 = vunpack.c.l.b16 %v334
    %v353 = vunpack.c.h.b16 %v334
    %v354 = vunpack.c.l.b16 %v335
    %v355 = vunpack.c.h.b16 %v335
    %v356 = vunpack.c.l.b16 %v336
    %v357 = vunpack.c.h.b16 %v336
    %v358 = vunpack.c.l.b16 %v337
    %v359 = vunpack.c.h.b16 %v337
    %v360 = vunpack.c.l.b16 %v338
    %v361 = vunpack.c.h.b16 %v338
    %v362 = vunpack.c.l.b16 %v339
    %v363 = vunpack.c.h.b16 %v339
    %v364 = vpack.c.b16 %v348, %v348
    %v365 = vpack.c.b16 %v349, %v349
    %v366 = vpack.c.b16 %v350, %v350
    %v367 = vpack.c.b16 %v351, %v351
    %v368 = vpack.c.b16 %v352, %v352
    %v369 = vpack.c.b16 %v353, %v353
    %v370 = vpack.c.b16 %v354, %v354
    %v371 = vpack.c.b16 %v355, %v355
    %v372 = vpack.c.b16 %v356, %v356
    %v373 = vpack.c.b16 %v357, %v357
    %v374 = vpack.c.b16 %v358, %v358
    %v375 = vpack.c.b16 %v359, %v359
    %v376 = vpack.c.b16 %v360, %v360
    %v377 = vpack.c.b16 %v361, %v361
    %v378 = vpack.c.b16 %v362, %v362
    %v379 = vpack.c.b16 %v363, %v363
    %396 = vst [vmem:[%s2] sm:$0xf] %v364
    %397 = vst [vmem:[%s2 + $0x4] sm:$0xf] %v365
    %398 = vst [vmem:[%s2 + $0x8] sm:$0xf] %v366
    %399 = vst [vmem:[%s2 + $0xc] sm:$0xf] %v367
    %400 = vst [vmem:[%s2 + $0x10] sm:$0xf] %v368
    %401 = vst [vmem:[%s2 + $0x14] sm:$0xf] %v369
    %402 = vst [vmem:[%s2 + $0x18] sm:$0xf] %v370
    %403 = vst [vmem:[%s2 + $0x1c] sm:$0xf] %v371
    %404 = vst [vmem:[%s2 + $0x20] sm:$0xf] %v372
    %405 = vst [vmem:[%s2 + $0x24] sm:$0xf] %v373
    %406 = vst [vmem:[%s2 + $0x28] sm:$0xf] %v374
    %407 = vst [vmem:[%s2 + $0x2c] sm:$0xf] %v375
    %408 = vst [vmem:[%s2 + $0x30] sm:$0xf] %v376
    %409 = vst [vmem:[%s2 + $0x34] sm:$0xf] %v377
    %410 = vst [vmem:[%s2 + $0x38] sm:$0xf] %v378
    %411 = vst [vmem:[%s2 + $0x3c] sm:$0xf] %v379
    %v412 = vadd.f32 %v316, %v317
    %v413 = vadd.f32 %v412, %v318
    %v414 = vadd.f32 %v413, %v319
    %v415 = vadd.f32 %v414, %v320
    %v416 = vadd.f32 %v415, %v321
    %v417 = vadd.f32 %v416, %v322
    %v418 = vadd.f32 %v417, %v323
    %v419 = vadd.f32 %v418, %v324
    %v420 = vadd.f32 %v419, %v325
    %v421 = vadd.f32 %v420, %v326
    %v422 = vadd.f32 %v421, %v327
    %v423 = vadd.f32 %v422, %v328
    %v424 = vadd.f32 %v423, %v329
    %v425 = vadd.f32 %v424, %v330
    %v426 = vadd.f32 %v425, %v331
    %v427 = vrot.slane %v426, 4
    %v428 = vadd.f32 %v426, %v427
    %v429 = vrot.slane %v428, 2
    %v430 = vadd.f32 %v428, %v429
    %v431 = vrot.slane %v430, 1
    %v432 = vadd.f32 %v430, %v431
    %433 = vst [vmem:[%s3] sm:$0x1] %v432
    %v434 = vmul.f32 %v316, %v316
    %v435 = vmul.f32 %v317, %v317
    %v436 = vmul.f32 %v318, %v318
    %v437 = vmul.f32 %v319, %v319
    %v438 = vmul.f32 %v320, %v320
    %v439 = vmul.f32 %v321, %v321
    %v440 = vmul.f32 %v322, %v322
    %v441 = vmul.f32 %v323, %v323
    %v442 = vmul.f32 %v324, %v324
    %v443 = vmul.f32 %v325, %v325
    %v444 = vmul.f32 %v326, %v326
    %v445 = vmul.f32 %v327, %v327
    %v446 = vmul.f32 %v328, %v328
    %v447 = vmul.f32 %v329, %v329
    %v448 = vmul.f32 %v330, %v330
    %v449 = vmul.f32 %v331, %v331
    %v450 = vadd.f32 %v434, %v435
    %v451 = vadd.f32 %v450, %v436
    %v452 = vadd.f32 %v451, %v437
    %v453 = vadd.f32 %v452, %v438
    %v454 = vadd.f32 %v453, %v439
    %v455 = vadd.f32 %v454, %v440
    %v456 = vadd.f32 %v455, %v441
    %v457 = vadd.f32 %v456, %v442
    %v458 = vadd.f32 %v457, %v443
    %v459 = vadd.f32 %v458, %v444
    %v460 = vadd.f32 %v459, %v445
    %v461 = vadd.f32 %v460, %v446
    %v462 = vadd.f32 %v461, %v447
    %v463 = vadd.f32 %v462, %v448
    %v464 = vadd.f32 %v463, %v449
    %v465 = vrot.slane %v464, 4
    %v466 = vadd.f32 %v464, %v465
    %v467 = vrot.slane %v466, 2
    %v468 = vadd.f32 %v466, %v467
    %v469 = vrot.slane %v468, 1
    %v470 = vadd.f32 %v468, %v469
    %471 = vst [vmem:[%s4] sm:$0x1] %v470
  $region17: #{cbl_forward.2} parent=0 // pred_fallthru
    _
  // Predicated region
  $region18: #{cbl_forward.2} parent=0 // pred_check
    _
  $region19: #{cbl_forward.2} parent=0 // pred_check_branch
    %473 = sbr.rel (0) target = $region21
  $region20: #{cbl_forward.2} parent=0 // pred_region
    _
  $region21: #{cbl_forward.2} parent=0 // pred_fallthru
    _
  // Predicated region
  $region22: #{cbl_forward.2} parent=0 // pred_check
    _
  $region23: #{cbl_forward.2} parent=0 // pred_check_branch
    %475 = sbr.rel (0) target = $region25
  $region24: #{cbl_forward.2} parent=0 // pred_region
    _
  $region25: #{cbl_forward.2} parent=0 // pred_fallthru
    _
  // Predicated region
  $region26: #{cbl_forward.2} parent=0 // pred_check
    _
  $region27: #{cbl_forward.2} parent=0 // pred_check_branch
    %477 = sbr.rel (0) target = $region29
  $region28: #{cbl_forward.2} parent=0 // pred_region
    _
  $region29: #{cbl_forward.2} parent=0 // pred_fallthru
    _
  // Predicated region
  $region30: #{cbl_forward.2} parent=0 // pred_check
    _
  $region31: #{cbl_forward.2} parent=0 // pred_check_branch
    %479 = sbr.rel (0) target = $region33
  $region32: #{cbl_forward.2} parent=0 // pred_region
    _
  $region33: #{cbl_forward.2} parent=0 // pred_fallthru
    _
  // Predicated region
  $region34: #{cbl_forward.2} parent=0 // pred_check
    _
  $region35: #{cbl_forward.2} parent=0 // pred_check_branch
    %481 = sbr.rel (0) target = $region37
  $region36: #{cbl_forward.2} parent=0 // pred_region
    _
  $region37: #{cbl_forward.2} parent=0 // pred_fallthru
    _
  // Predicated region
  $region38: #{cbl_forward.2} parent=0 // pred_check
    _
  $region39: #{cbl_forward.2} parent=0 // pred_check_branch
    %483 = sbr.rel (0) target = $region41
  $region40: #{cbl_forward.2} parent=0 // pred_region
    _
  $region41: #{cbl_forward.2} parent=0 // pred_fallthru
    _

</llo_original>
